<compile_context>
chip_gen: v7x
topology: tpu7x:2x2x1
jax: 0.10.0
libtpu: 0.0.40
codegen_flags: <defaults>
</compile_context>

<pallas_src>
import jax
import jax.numpy as jnp
from jax.experimental import pallas as pl
from jax.experimental.pallas import tpu as pltpu


def _mlp_kernel(x_ref, wb_ref, o_ref):
    # x_ref: (B, IN), wb_ref: (IN+1, OUT) with wb[IN] = bias, o_ref: (B, OUT)
    x = x_ref[...]
    wb = wb_ref[...]
    in_dim = x_ref.shape[1]

    # Bias row broadcast over the batch, then K-unrolled VPU FMAs
    # (K is tiny and static, so a Python loop fully unrolls at trace time).
    y = jnp.zeros(o_ref.shape, dtype=jnp.float32) + wb[in_dim:in_dim + 1, :]
    for k in range(in_dim):
        y = y + x[:, k:k + 1] * wb[k:k + 1, :]

    y = jnp.maximum(y, 0.0)       # ReLU
    y = jnp.tanh(jnp.tanh(y))     # Tanh -> Tanh (intentional, per the module)
    o_ref[...] = y.astype(o_ref.dtype)


def mlp_forward(x, w, b):
    """x: (B, IN) f32, w: (IN, OUT) f32, b: (OUT,) f32 -> (B, OUT) f32."""
    B, IN = x.shape
    OUT = w.shape[1]
    # Fold bias into the weight tensor -> one fewer input DMA stream.
    wb = jnp.concatenate([w, b.reshape(1, OUT)], axis=0)  # (IN+1, OUT)

    return pl.pallas_call(
        _mlp_kernel,
        out_shape=jax.ShapeDtypeStruct((B, OUT), jnp.float32),
        in_specs=[
            pl.BlockSpec(memory_space=pltpu.MemorySpace.VMEM),
            pl.BlockSpec(memory_space=pltpu.MemorySpace.VMEM),
        ],
        out_specs=pl.BlockSpec(memory_space=pltpu.MemorySpace.VMEM),
    )(x, wb)


if __name__ == "__main__":
    key = jax.random.PRNGKey(0)
    kx, kw, kb = jax.random.split(key, 3)

    B, IN, OUT = 2, 2, 3

    # Deterministic example input (matches torch.randn(2, 2) shape).
    x = jax.random.normal(kx, (B, IN), dtype=jnp.float32)

    # nn.Linear-style uniform(-1/sqrt(IN), 1/sqrt(IN)) init.
    bound = 1.0 / jnp.sqrt(jnp.float32(IN))
    w_t = jax.random.uniform(kw, (OUT, IN), minval=-bound, maxval=bound,
                             dtype=jnp.float32)  # torch layout (OUT, IN)
    b = jax.random.uniform(kb, (OUT,), minval=-bound, maxval=bound,
                           dtype=jnp.float32)
    w = w_t.T  # (IN, OUT) for the kernel's x @ W formulation

    out = mlp_forward(x, w, b)
    out = jax.block_until_ready(out)

    # Reference check in plain JAX (same math as the PyTorch module).
    ref = jnp.tanh(jnp.tanh(jnp.maximum(x @ w + b, 0.0)))
    assert out.shape == (B, OUT)
    assert jnp.allclose(out, ref, atol=1e-5, rtol=1e-5)

    print("KERNEL_OK")
</pallas_src>

<mosaic_0001>
module attributes {stable_mosaic.version = 11 : i64} {
  func.func @_mlp_kernel(%arg0: memref<2x2xf32, #tpu.memory_space<vmem>>, %arg1: memref<3x3xf32, #tpu.memory_space<vmem>>, %arg2: memref<2x3xf32, #tpu.memory_space<vmem>>) attributes {dimension_semantics = [], scalar_prefetch = 0 : i64, scratch_operands = 0 : i64, tpu.core_type = #tpu.core_type<tc>} {
    %c0 = arith.constant 0 : index
    %c0_0 = arith.constant 0 : index
    %0 = vector.load %arg0[%c0, %c0_0] : memref<2x2xf32, #tpu.memory_space<vmem>>, vector<2x2xf32>
    %c0_1 = arith.constant 0 : index
    %c0_2 = arith.constant 0 : index
    %1 = vector.load %arg1[%c0_1, %c0_2] : memref<3x3xf32, #tpu.memory_space<vmem>>, vector<3x3xf32>
    %cst = arith.constant 0.000000e+00 : f32
    %2 = vector.broadcast %cst : f32 to vector<2x3xf32>
    %3 = vector.extract_strided_slice %1 {offsets = [2, 0], sizes = [1, 3], strides = [1, 1]} : vector<3x3xf32> to vector<1x3xf32>
    %4 = vector.broadcast %3 : vector<1x3xf32> to vector<2x3xf32>
    %5 = arith.addf %2, %4 : vector<2x3xf32>
    %6 = vector.extract_strided_slice %0 {offsets = [0, 0], sizes = [2, 1], strides = [1, 1]} : vector<2x2xf32> to vector<2x1xf32>
    %7 = vector.extract_strided_slice %1 {offsets = [0, 0], sizes = [1, 3], strides = [1, 1]} : vector<3x3xf32> to vector<1x3xf32>
    %8 = vector.broadcast %6 : vector<2x1xf32> to vector<2x3xf32>
    %9 = vector.broadcast %7 : vector<1x3xf32> to vector<2x3xf32>
    %10 = arith.mulf %8, %9 : vector<2x3xf32>
    %11 = arith.addf %5, %10 : vector<2x3xf32>
    %12 = vector.extract_strided_slice %0 {offsets = [0, 1], sizes = [2, 1], strides = [1, 1]} : vector<2x2xf32> to vector<2x1xf32>
    %13 = vector.extract_strided_slice %1 {offsets = [1, 0], sizes = [1, 3], strides = [1, 1]} : vector<3x3xf32> to vector<1x3xf32>
    %14 = vector.broadcast %12 : vector<2x1xf32> to vector<2x3xf32>
    %15 = vector.broadcast %13 : vector<1x3xf32> to vector<2x3xf32>
    %16 = arith.mulf %14, %15 : vector<2x3xf32>
    %17 = arith.addf %11, %16 : vector<2x3xf32>
    %cst_3 = arith.constant 0.000000e+00 : f32
    %18 = vector.broadcast %cst_3 : f32 to vector<2x3xf32>
    %19 = arith.maximumf %17, %18 : vector<2x3xf32>
    %20 = math.tanh %19 : vector<2x3xf32>
    %21 = math.tanh %20 : vector<2x3xf32>
    %c0_4 = arith.constant 0 : index
    %c0_5 = arith.constant 0 : index
    %22 = vector.load %arg2[%c0_4, %c0_5] : memref<2x3xf32, #tpu.memory_space<vmem>>, vector<2x3xf32>
    tpu.vector_store %arg2[%c0_4, %c0_5], %21 {strides = array<i32>} : memref<2x3xf32, #tpu.memory_space<vmem>>, vector<2x3xf32>,
    return
  }
}

</mosaic_0001>

<llo_original>
// kernel: tpu_custom_call.1
$region0: #{tpu_custom_call.1}
  #allocation0 [shape = 'u32[]', space=smem, size = 0x4, offset = 0x4, fixed_abs, tag = 'smem constant byte address 0x4 - core index']
  #allocation1 [shape = 'u32[144,128]{1,0:T(1,128)}', space=vmem, size = 0x12000, scoped, tag = 'internal scratch']
  %s0 = inlined_call_operand.hbm [shape: f32[2,2], index: 0, kind: input, shape index: {}]
  %s1 = inlined_call_operand.hbm [shape: f32[3,3], index: 1, kind: input, shape index: {}]
  %s2 = inlined_call_operand.hbm [shape: f32[2,3], index: 2, kind: output, shape index: {}]
  %s3 = sld [smem:[#allocation0]]
  $region26: #{tpu_custom_call.1} parent=0
    _
  %s5 = ssub.s32 1, %s3
  %s6 = scalar_select 0, %s5, %s3
  $region1: #{tpu_custom_call.1} parent=0
    #allocation2 [shape = 'u8[1024]{0}', space=vmem, size = 0x400, scoped, tag = 'input window, operand 0, single buffered']
    #allocation3 [shape = 's32[1]{0}', space=sflag, size = 0x4, scoped, tag = 'scoped memory for tpu_custom_call.1']
    #allocation4 [shape = 's32[1]{0}', space=sflag, size = 0x4, scoped, tag = 'scoped memory for tpu_custom_call.1']
    #allocation5 [shape = 'u8[2048]{0}', space=vmem, size = 0x800, scoped, tag = 'input window, operand 1, single buffered']
    #allocation6 [shape = 's32[1]{0}', space=sflag, size = 0x4, scoped, tag = 'scoped memory for tpu_custom_call.1']
    #allocation7 [shape = 'u8[1024]{0}', space=vmem, size = 0x400, scoped, tag = 'output window, operand 0, single buffered']
    %7 = vsyncpa [#allocation3], 0
    %8 = vsyncpa [#allocation6], 0
    %9 = vsyncpa [#allocation4], 0
    // Predicated region
    $region2: #{tpu_custom_call.1} parent=1 // pred_check
      _
    $region3: #{tpu_custom_call.1} parent=1 // pred_check_branch
      %11 = sbr.rel (0) target = $region5
    $region4: #{tpu_custom_call.1} parent=1 // pred_region
      %s13 = ssub.s32 32, 32
      %14 = vsyncadd [#allocation3], %s13
      %s16 = sshll.u32 [#allocation2], 4
      %s17 = int_to_ptr.vmem [resolvable:$true] %s16
      %19 = dma.hbm_to_vmem [thread:$0]  %s0, 32, %s17, [#allocation3]
    $region5: #{tpu_custom_call.1} parent=1 // pred_fallthru
      _
    // Predicated region
    $region6: #{tpu_custom_call.1} parent=1 // pred_check
      _
    $region7: #{tpu_custom_call.1} parent=1 // pred_check_branch
      %21 = sbr.rel (0) target = $region9
    $region8: #{tpu_custom_call.1} parent=1 // pred_region
      %s23 = ssub.s32 64, 64
      %24 = vsyncadd [#allocation6], %s23
      %s26 = sshll.u32 [#allocation5], 4
      %s27 = int_to_ptr.vmem [resolvable:$true] %s26
      %29 = dma.hbm_to_vmem [thread:$0]  %s1, 64, %s27, [#allocation6]
    $region9: #{tpu_custom_call.1} parent=1 // pred_fallthru
      _
    // Predicated region
    $region10: #{tpu_custom_call.1} parent=1 // pred_check
      _
    $region11: #{tpu_custom_call.1} parent=1 // pred_check_branch
      %31 = sbr.rel (0) target = $region13
    $region12: #{tpu_custom_call.1} parent=1 // pred_region
      %32 = dma.done [#allocation3], 32
    $region13: #{tpu_custom_call.1} parent=1 // pred_fallthru
      _
    // Predicated region
    $region14: #{tpu_custom_call.1} parent=1 // pred_check
      _
    $region15: #{tpu_custom_call.1} parent=1 // pred_check_branch
      %34 = sbr.rel (0) target = $region17
    $region16: #{tpu_custom_call.1} parent=1 // pred_region
      %35 = dma.done [#allocation6], 64
    $region17: #{tpu_custom_call.1} parent=1 // pred_fallthru
      _
    %v36 = vld [vmem:[#allocation2] sm:$0x3]
    %v37 = vld [vmem:[#allocation5] sm:$0x7]
    %v38 = vlaneseq
    %v39 = vshrl.u32 %v38, 7
    %v40 = vsub.s32 2, %v39
    %v41 = vrot.slane %v37, %v40
    %v42 = vadd.f32 %v41, 0.0
    %44 = vset.pattern.permute.xlu0 0
    %45 = vperm.xlu0 %44, %v36
    %v46 = vpop.permute.xlu0 %45
    %v48 = vlaneseq
    %v49 = vshrl.u32 %v48, 7
    %v50 = vsub.s32 0, %v49
    %v51 = vrot.slane %v37, %v50
    %v52 = vmul.f32 %v46, %v51
    %v53 = vadd.f32 %v42, %v52
    %54 = vset.pattern.permute.xlu0 1
    %55 = vperm.xlu0 %54, %v36
    %v56 = vpop.permute.xlu0 %55
    %v58 = vlaneseq
    %v59 = vshrl.u32 %v58, 7
    %v60 = vsub.s32 1, %v59
    %v61 = vrot.slane %v37, %v60
    %v62 = vmul.f32 %v56, %v61
    %v63 = vadd.f32 %v53, %v62
    %v64 = vmax.f32 %v63, 0.0
    %v65 = vtanh.pop %v64
    %v66 = vtanh.pop %v65
    %vm67 = vcmask 17408
    %68 = vst.msk [vmem:[#allocation7] sm:$0x3] %vm67, %v66
    // Predicated region
    $region18: #{tpu_custom_call.1} parent=1 // pred_check
      _
    $region19: #{tpu_custom_call.1} parent=1 // pred_check_branch
      %70 = sbr.rel (0) target = $region21
    $region20: #{tpu_custom_call.1} parent=1 // pred_region
      %s72 = ssub.s32 32, 32
      %73 = vsyncadd [#allocation4], %s72
      %s75 = sshll.u32 [#allocation7], 4
      %s76 = int_to_ptr.vmem [resolvable:$true] %s75
      %78 = dma.vmem_to_hbm [thread:$0]  %s76, 32, %s2, [#allocation4]
    $region21: #{tpu_custom_call.1} parent=1 // pred_fallthru
      _
    // Predicated region
    $region22: #{tpu_custom_call.1} parent=1 // pred_check
      _
    $region23: #{tpu_custom_call.1} parent=1 // pred_check_branch
      %80 = sbr.rel (0) target = $region25
    $region24: #{tpu_custom_call.1} parent=1 // pred_region
      %81 = dma.done [#allocation4], 32
    $region25: #{tpu_custom_call.1} parent=1 // pred_fallthru
      _
    %82 = vsyncpa [#allocation3], 1
    %83 = vsyncpa [#allocation6], 1
    %84 = vsyncpa [#allocation4], 1

</llo_original>
